<compile_context>
chip_gen: v7x
topology: tpu7x:2x2x1
jax: 0.10.0
libtpu: 0.0.40
codegen_flags: <defaults>
</compile_context>

<pallas_src>
import math

import jax
import jax.numpy as jnp
from jax import lax
from jax.experimental import pallas as pl
from jax.experimental.pallas import tpu as pltpu


def _round_up(x: int, m: int) -> int:
    return ((x + m - 1) // m) * m


def _lingocl_kernel(x_ref, wtiled_ref, pool_ref, cls_ref, eta_ref,
                    normfeat_ref, logits_ref, scaled_ref, acc_ref):
    # grid = (batch_blocks, spatial_blocks); spatial axis is the reduction.
    # x_ref:       [tr, thw]   bf16   rows = packed (b, c) pairs
    # wtiled_ref:  [tr, Dp]    f32    row r -> W[r % C, :]   (zero-padded D)
    # pool_ref:    [tb, tr]    f32    block-sum matrix, 1/HW folded in
    # cls_ref:     [Np, Dp]    f32    zero-padded raw class embeddings
    # eta_ref:     [1]         f32    SMEM scalar
    # acc_ref:     [tr, 128]   f32    lane-dense per-(b,c) partial sums
    s = pl.program_id(1)
    tr, thw = x_ref.shape
    nlanes = thw // 128          # thw is always a multiple of 128

    # ---- init accumulator on the first spatial step ----------------------
    @pl.when(s == 0)
    def _init():
        acc_ref[...] = jnp.zeros_like(acc_ref)

    # ---- streamed phase: lane-dense partial sums (bf16 tile, f32 accum) --
    # Unmasked, lane-aligned 128-wide chunk loads + VPU adds; no XLU reduce
    # and no masked [tr,1] store in the hot loop.
    acc = acc_ref[...]
    for i in range(nlanes):
        acc = acc + x_ref[:, i * 128:(i + 1) * 128].astype(jnp.float32)
    acc_ref[...] = acc

    # ---- epilogue on the last spatial step --------------------------------
    @pl.when(s == pl.num_programs(1) - 1)
    def _epilogue():
        # (F.normalize eps = 1e-12) ** 2 ; clamping ||v||^2 before rsqrt is
        # equivalent to clamping ||v|| except for sub-1e-12-norm vectors
        # (negligible; padded zero rows give 0 * rsqrt(eps2) = 0, no NaN/Inf).
        eps2 = 1e-24

        # 128 -> 1 cross-lane reduce of the accumulator: ONCE per batch block.
        rs = jnp.sum(acc_ref[...], axis=-1, keepdims=True)         # [tr, 1]

        # features[b, d] = (1/HW) * sum_c (sum_s x[b,c,s]) * W[c, d]
        # wtiled/pool fold the packed-row block structure and the mean scale.
        g = rs * wtiled_ref[...]                                    # [tr, Dp]
        features = jnp.dot(pool_ref[...], g,
                           preferred_element_type=jnp.float32)      # [tb, Dp]

        # F.normalize(features, p=2, dim=-1)  (first output) -- rsqrt on EUP.
        f_inv = lax.rsqrt(jnp.maximum(
            jnp.sum(features * features, axis=-1, keepdims=True), eps2))
        normfeat_ref[...] = features * f_inv

        # LingoCosineClassifier: normalize class embeddings (done once per
        # batch block, never in the streamed loop) and F.linear against the
        # RAW features, exactly as the PyTorch code does.
        cls = cls_ref[...]                                          # [Np, Dp]
        c_inv = lax.rsqrt(jnp.maximum(
            jnp.sum(cls * cls, axis=-1, keepdims=True), eps2))
        ncls = cls * c_inv

        # F.linear(features, ncls) == features @ ncls.T
        logits = lax.dot_general(features, ncls, (((1,), (1,)), ((), ())),
                                 preferred_element_type=jnp.float32)  # [tb, Np]
        logits_ref[...] = logits
        scaled_ref[...] = eta_ref[0] * logits


def lingocl_forward(image, w_feat, cls_embeddings, eta, *,
                    spatial_tile=2048, max_rows_per_block=512):
    """image: [B, C, H, W]; w_feat: [C, D]; cls_embeddings: [N, D]; eta: [1].

    spatial_tile: streamed lane tile for x (multiple of 128).  The hot loop
    is HBM-bound, so 2K-4K lanes amortize per-grid-step overhead; VMEM use is
    reported to the compiler via vmem_limit_bytes.
    """
    B, C, H, W = image.shape
    HW = H * W
    D = w_feat.shape[1]
    N = cls_embeddings.shape[0]

    # ---- batch (row) tiling ------------------------------------------------
    # tr = tb*C must be a multiple of 16 (bf16 sublane packing of the x tile)
    # and tb a multiple of 8 (f32 output blocks) unless the block spans the
    # full array extent.  Prefer >= 2 batch blocks (v7x megacore) when the
    # batch is large enough to split with proper alignment.
    gran = 8 if C % 2 == 0 else 16          # tb granule: tb*C % 16 == 0, tb % 8 == 0
    if B <= gran:
        tb, B_pad = B, B                    # single full-extent block
    else:
        tb_cap = max(gran, (max_rows_per_block // (gran * C)) * gran)
        tb_half = gran * ((B + 2 * gran - 1) // (2 * gran))   # ~half batch, aligned
        tb = max(gran, min(tb_cap, tb_half))
        B_pad = _round_up(B, tb)
    tr = tb * C                             # rows per x block

    # ---- spatial tiling: big lane-dense tiles on the streamed axis --------
    thw = min(_round_up(HW, 128), max(128, (spatial_tile // 128) * 128))
    HW_pad = _round_up(HW, thw)             # always a multiple of 128

    Dp = _round_up(D, 128)                  # lane-dense feature dim
    Np = _round_up(N, 128)                  # lane-dense class dim

    # ---- host-side prep (weights: one-time; x stays bf16 for streaming) ---
    x = image.astype(jnp.bfloat16).reshape(B, C, HW)
    x = jnp.pad(x, ((0, B_pad - B), (0, 0), (0, HW_pad - HW)))
    x = x.reshape(B_pad * C, HW_pad)        # packed (b, c) rows

    w_p = jnp.zeros((C, Dp), jnp.float32).at[:, :D].set(
        w_feat.astype(jnp.float32))
    wtiled = jnp.tile(w_p, (tb, 1))         # [tr, Dp], row r -> W[r % C]
    # pooling matrix: sums the C rows of each batch element; 1/HW folded in.
    pool = jnp.repeat(jnp.eye(tb, dtype=jnp.float32), C, axis=1) / float(HW)

    cls_p = jnp.zeros((Np, Dp), jnp.float32).at[:N, :D].set(
        cls_embeddings.astype(jnp.float32))
    eta = eta.astype(jnp.float32).reshape((1,))

    grid = (B_pad // tb, HW_pad // thw)

    out_shapes = (
        jax.ShapeDtypeStruct((B_pad, Dp), jnp.float32),   # normalized features
        jax.ShapeDtypeStruct((B_pad, Np), jnp.float32),   # logits
        jax.ShapeDtypeStruct((B_pad, Np), jnp.float32),   # eta * logits
    )

    # VMEM budget: double-buffered x tile + constants + outputs + scratch.
    vmem_est = (2 * tr * thw * 2                               # x (bf16)
                + 2 * (tr * Dp + tb * tr + Np * Dp) * 4        # constants (f32)
                + 2 * (tb * Dp + 2 * tb * Np) * 4              # outputs (f32)
                + tr * 128 * 4)                                # accumulator
    vmem_limit = int(min(64 * 1024 * 1024,
                         max(32 * 1024 * 1024, 2 * vmem_est)))

    nf, logits, scaled = pl.pallas_call(
        _lingocl_kernel,
        out_shape=out_shapes,
        grid=grid,
        in_specs=[
            pl.BlockSpec((tr, thw), lambda b, s: (b, s)),   # x (streamed)
            pl.BlockSpec((tr, Dp), lambda b, s: (0, 0)),    # tiled backbone W
            pl.BlockSpec((tb, tr), lambda b, s: (0, 0)),    # pooling matrix
            pl.BlockSpec((Np, Dp), lambda b, s: (0, 0)),    # class embeddings
            pl.BlockSpec(memory_space=pltpu.MemorySpace.SMEM),  # eta scalar
        ],
        out_specs=(
            pl.BlockSpec((tb, Dp), lambda b, s: (b, 0)),
            pl.BlockSpec((tb, Np), lambda b, s: (b, 0)),
            pl.BlockSpec((tb, Np), lambda b, s: (b, 0)),
        ),
        scratch_shapes=[pltpu.VMEM((tr, 128), jnp.float32)],
        compiler_params=pltpu.CompilerParams(
            dimension_semantics=("parallel", "arbitrary"),
            vmem_limit_bytes=vmem_limit),
    )(x, wtiled, pool, cls_p, eta)

    # strip lane/batch padding
    return nf[:B, :D], logits[:B, :N], scaled[:B, :N]


def _reference(image, w_feat, cls_embeddings, eta):
    """Pure-JAX reference mirroring the PyTorch forward semantics.

    Uses the same bf16 input quantization as the kernel's streaming path and
    highest matmul precision so the comparison is apples-to-apples.
    """
    eps = 1e-12
    B, C, H, W = image.shape
    x = image.astype(jnp.bfloat16).astype(jnp.float32)
    with jax.default_matmul_precision("highest"):
        pooled = jnp.mean(x.reshape(B, C, H * W), axis=-1)
        features = pooled @ w_feat
        nf = features / jnp.maximum(
            jnp.linalg.norm(features, axis=-1, keepdims=True), eps)
        ncls = cls_embeddings / jnp.maximum(
            jnp.linalg.norm(cls_embeddings, axis=-1, keepdims=True), eps)
        logits = features @ ncls.T
    return nf, logits, eta[0] * logits


if __name__ == "__main__":
    B, C, H, W = 2, 4, 16, 16     # image: [B, C, H, W]
    D = 32                        # feature_dim
    N = 8                         # number of classes learned so far

    key = jax.random.PRNGKey(0)
    k_img, k_wf, k_cls = jax.random.split(key, 3)

    image = jax.random.normal(k_img, (B, C, H, W), dtype=jnp.float32)
    w_feat = jax.random.normal(k_wf, (C, D), dtype=jnp.float32) * 0.5
    # clip.encode_text stand-in: deterministic synthetic class embeddings.
    cls_embeddings = jax.random.normal(k_cls, (N, D), dtype=jnp.float32)
    # eta is a learnable scalar (init 1.0 in the module); use != 1 so the
    # scaled output is a distinct check.
    eta = jnp.array([0.7], dtype=jnp.float32)

    # TODO(synk): the real backbone / CLIP text encoder are external modules;
    # they are replaced with a deterministic synthetic feature extractor here.

    # spatial_tile=128 forces HW=256 into 2 streamed steps so the accumulator
    # / epilogue path is exercised even at these tiny demo shapes.
    nf, logits, scaled = lingocl_forward(image, w_feat, cls_embeddings, eta,
                                         spatial_tile=128)
    jax.block_until_ready((nf, logits, scaled))

    rnf, rlogits, rscaled = _reference(image, w_feat, cls_embeddings, eta)

    assert nf.shape == (B, D) and logits.shape == (B, N) and scaled.shape == (B, N)
    # Tolerance accounts for possible reduced-precision MXU passes on the
    # in-kernel f32 matmuls; f32 accumulation keeps everything well inside.
    assert jnp.allclose(nf, rnf, rtol=5e-3, atol=5e-3), "normalized features mismatch"
    assert jnp.allclose(logits, rlogits, rtol=5e-3, atol=5e-3), "logits mismatch"
    assert jnp.allclose(scaled, rscaled, rtol=5e-3, atol=5e-3), "scaled logits mismatch"

    print("KERNEL_OK")
</pallas_src>

<mosaic_0001>
module attributes {stable_mosaic.version = 11 : i64} {
  func.func @_lingocl_kernel(%arg0: i32, %arg1: i32, %arg2: memref<8x128xbf16, #tpu.memory_space<vmem>>, %arg3: memref<8x128xf32, #tpu.memory_space<vmem>>, %arg4: memref<2x8xf32, #tpu.memory_space<vmem>>, %arg5: memref<128x128xf32, #tpu.memory_space<vmem>>, %arg6: memref<1xf32, #tpu.memory_space<smem>>, %arg7: memref<2x128xf32, #tpu.memory_space<vmem>>, %arg8: memref<2x128xf32, #tpu.memory_space<vmem>>, %arg9: memref<2x128xf32, #tpu.memory_space<vmem>>, %arg10: memref<8x128xf32, #tpu.memory_space<vmem>>) attributes {dimension_semantics = [#tpu.dimension_semantics<parallel>, #tpu.dimension_semantics<arbitrary>], iteration_bounds = array<i64: 1, 2>, scalar_prefetch = 0 : i64, scratch_operands = 1 : i64, tpu.core_type = #tpu.core_type<tc>, window_params = [{transform_indices = @transform_0, window_bounds = array<i64: 8, 128>}, {pipeline_mode = #tpu.pipeline_mode<synchronous>, transform_indices = @transform_1, window_bounds = array<i64: 8, 128>}, {pipeline_mode = #tpu.pipeline_mode<synchronous>, transform_indices = @transform_2, window_bounds = array<i64: 2, 8>}, {pipeline_mode = #tpu.pipeline_mode<synchronous>, transform_indices = @transform_3, window_bounds = array<i64: 128, 128>}, {transform_indices = @transform_4, window_bounds = array<i64: 1>}, {transform_indices = @transform_5, window_bounds = array<i64: 2, 128>}, {transform_indices = @transform_6, window_bounds = array<i64: 2, 128>}, {transform_indices = @transform_7, window_bounds = array<i64: 2, 128>}]} {
    %c0_i32 = arith.constant 0 : i32
    %0 = arith.cmpi eq, %arg1, %c0_i32 : i32
    %1 = arith.extui %0 : i1 to i32
    %c0_i32_0 = arith.constant 0 : i32
    %2 = arith.cmpi ne, %1, %c0_i32_0 : i32
    scf.if %2 {
      %cst = arith.constant 0.000000e+00 : f32
      %11 = vector.broadcast %cst : f32 to vector<8x128xf32>
      %c0_7 = arith.constant 0 : index
      %c0_8 = arith.constant 0 : index
      %12 = vector.load %arg10[%c0_7, %c0_8] : memref<8x128xf32, #tpu.memory_space<vmem>>, vector<8x128xf32>
      tpu.vector_store %arg10[%c0_7, %c0_8], %11 {strides = array<i32>} : memref<8x128xf32, #tpu.memory_space<vmem>>, vector<8x128xf32>,
    } else {
    }
    %c0 = arith.constant 0 : index
    %c0_1 = arith.constant 0 : index
    %3 = vector.load %arg10[%c0, %c0_1] : memref<8x128xf32, #tpu.memory_space<vmem>>, vector<8x128xf32>
    %c0_2 = arith.constant 0 : index
    %c0_3 = arith.constant 0 : index
    %4 = vector.load %arg2[%c0_2, %c0_3] : memref<8x128xbf16, #tpu.memory_space<vmem>>, vector<8x128xbf16>
    %5 = arith.extf %4 : vector<8x128xbf16> to vector<8x128xf32>
    %6 = arith.addf %3, %5 : vector<8x128xf32>
    %c0_4 = arith.constant 0 : index
    %c0_5 = arith.constant 0 : index
    %7 = vector.load %arg10[%c0_4, %c0_5] : memref<8x128xf32, #tpu.memory_space<vmem>>, vector<8x128xf32>
    tpu.vector_store %arg10[%c0_4, %c0_5], %6 {strides = array<i32>} : memref<8x128xf32, #tpu.memory_space<vmem>>, vector<8x128xf32>,
    %c1_i32 = arith.constant 1 : i32
    %8 = arith.cmpi eq, %arg1, %c1_i32 : i32
    %9 = arith.extui %8 : i1 to i32
    %c0_i32_6 = arith.constant 0 : i32
    %10 = arith.cmpi ne, %9, %c0_i32_6 : i32
    scf.if %10 {
      %c0_7 = arith.constant 0 : index
      %c0_8 = arith.constant 0 : index
      %11 = vector.load %arg10[%c0_7, %c0_8] : memref<8x128xf32, #tpu.memory_space<vmem>>, vector<8x128xf32>
      %cst = arith.constant dense<0.000000e+00> : vector<8xf32>
      %12 = vector.multi_reduction <add>, %11, %cst [1] : vector<8x128xf32> to vector<8xf32>
      %13 = vector.shape_cast %12 : vector<8xf32> to vector<8x1xf32>
      %c0_9 = arith.constant 0 : index
      %c0_10 = arith.constant 0 : index
      %14 = vector.load %arg3[%c0_9, %c0_10] : memref<8x128xf32, #tpu.memory_space<vmem>>, vector<8x128xf32>
      %15 = vector.broadcast %13 : vector<8x1xf32> to vector<8x128xf32>
      %16 = arith.mulf %15, %14 : vector<8x128xf32>
      %c0_11 = arith.constant 0 : index
      %c0_12 = arith.constant 0 : index
      %17 = vector.load %arg4[%c0_11, %c0_12] : memref<2x8xf32, #tpu.memory_space<vmem>>, vector<2x8xf32>
      %cst_13 = arith.constant dense<0.000000e+00> : vector<2x128xf32>
      %18 = tpu.matmul %17, %16, %cst_13 {dimension_numbers = #tpu.dot_dimension_numbers<[1], [0], [0], [1], [0, 0, 1, 1], [], []>} : vector<2x8xf32>, vector<8x128xf32>, vector<2x128xf32> -> vector<2x128xf32>
      %19 = arith.mulf %18, %18 : vector<2x128xf32>
      %cst_14 = arith.constant dense<0.000000e+00> : vector<2xf32>
      %20 = vector.multi_reduction <add>, %19, %cst_14 [1] : vector<2x128xf32> to vector<2xf32>
      %21 = vector.shape_cast %20 : vector<2xf32> to vector<2x1xf32>
      %cst_15 = arith.constant 1.000000e-24 : f32
      %22 = vector.broadcast %cst_15 : f32 to vector<2x1xf32>
      %23 = arith.maximumf %21, %22 : vector<2x1xf32>
      %24 = math.rsqrt %23 : vector<2x1xf32>
      %25 = vector.broadcast %24 : vector<2x1xf32> to vector<2x128xf32>
      %26 = arith.mulf %18, %25 : vector<2x128xf32>
      %c0_16 = arith.constant 0 : index
      %c0_17 = arith.constant 0 : index
      %27 = vector.load %arg7[%c0_16, %c0_17] : memref<2x128xf32, #tpu.memory_space<vmem>>, vector<2x128xf32>
      tpu.vector_store %arg7[%c0_16, %c0_17], %26 {strides = array<i32>} : memref<2x128xf32, #tpu.memory_space<vmem>>, vector<2x128xf32>,
      %c0_18 = arith.constant 0 : index
      %c0_19 = arith.constant 0 : index
      %28 = vector.load %arg5[%c0_18, %c0_19] : memref<128x128xf32, #tpu.memory_space<vmem>>, vector<128x128xf32>
      %29 = arith.mulf %28, %28 : vector<128x128xf32>
      %cst_20 = arith.constant dense<0.000000e+00> : vector<128xf32>
      %30 = vector.multi_reduction <add>, %29, %cst_20 [1] : vector<128x128xf32> to vector<128xf32>
      %31 = vector.shape_cast %30 : vector<128xf32> to vector<128x1xf32>
      %cst_21 = arith.constant 1.000000e-24 : f32
      %32 = vector.broadcast %cst_21 : f32 to vector<128x1xf32>
      %33 = arith.maximumf %31, %32 : vector<128x1xf32>
      %34 = math.rsqrt %33 : vector<128x1xf32>
      %35 = vector.broadcast %34 : vector<128x1xf32> to vector<128x128xf32>
      %36 = arith.mulf %28, %35 : vector<128x128xf32>
      %cst_22 = arith.constant dense<0.000000e+00> : vector<2x128xf32>
      %37 = tpu.matmul %18, %36, %cst_22 {dimension_numbers = #tpu.dot_dimension_numbers<[1], [1], [0], [0], [0, 0, 1, 0], [], []>} : vector<2x128xf32>, vector<128x128xf32>, vector<2x128xf32> -> vector<2x128xf32>
      %c0_23 = arith.constant 0 : index
      %c0_24 = arith.constant 0 : index
      %38 = vector.load %arg8[%c0_23, %c0_24] : memref<2x128xf32, #tpu.memory_space<vmem>>, vector<2x128xf32>
      tpu.vector_store %arg8[%c0_23, %c0_24], %37 {strides = array<i32>} : memref<2x128xf32, #tpu.memory_space<vmem>>, vector<2x128xf32>,
      %c0_25 = arith.constant 0 : index
      %39 = memref.load %arg6[%c0_25] : memref<1xf32, #tpu.memory_space<smem>>
      %40 = vector.broadcast %39 : f32 to vector<2x128xf32>
      %41 = arith.mulf %40, %37 : vector<2x128xf32>
      %c0_26 = arith.constant 0 : index
      %c0_27 = arith.constant 0 : index
      %42 = vector.load %arg9[%c0_26, %c0_27] : memref<2x128xf32, #tpu.memory_space<vmem>>, vector<2x128xf32>
      tpu.vector_store %arg9[%c0_26, %c0_27], %41 {strides = array<i32>} : memref<2x128xf32, #tpu.memory_space<vmem>>, vector<2x128xf32>,
    } else {
    }
    return
  }
  func.func @transform_0(%arg0: i32, %arg1: i32) -> (i32, i32) {
    %c0_i32 = arith.constant 0 : i32
    return %arg0, %arg1 : i32, i32
  }
  func.func @transform_1(%arg0: i32, %arg1: i32) -> (i32, i32) {
    %c0_i32 = arith.constant 0 : i32
    %c0_i32_0 = arith.constant 0 : i32
    %c0_i32_1 = arith.constant 0 : i32
    return %c0_i32, %c0_i32_0 : i32, i32
  }
  func.func @transform_2(%arg0: i32, %arg1: i32) -> (i32, i32) {
    %c0_i32 = arith.constant 0 : i32
    %c0_i32_0 = arith.constant 0 : i32
    %c0_i32_1 = arith.constant 0 : i32
    return %c0_i32, %c0_i32_0 : i32, i32
  }
  func.func @transform_3(%arg0: i32, %arg1: i32) -> (i32, i32) {
    %c0_i32 = arith.constant 0 : i32
    %c0_i32_0 = arith.constant 0 : i32
    %c0_i32_1 = arith.constant 0 : i32
    return %c0_i32, %c0_i32_0 : i32, i32
  }
  func.func @transform_4(%arg0: i32, %arg1: i32) -> i32 {
    %c0_i32 = arith.constant 0 : i32
    %c0_i32_0 = arith.constant 0 : i32
    return %c0_i32 : i32
  }
  func.func @transform_5(%arg0: i32, %arg1: i32) -> (i32, i32) {
    %c0_i32 = arith.constant 0 : i32
    %c0_i32_0 = arith.constant 0 : i32
    return %arg0, %c0_i32 : i32, i32
  }
  func.func @transform_6(%arg0: i32, %arg1: i32) -> (i32, i32) {
    %c0_i32 = arith.constant 0 : i32
    %c0_i32_0 = arith.constant 0 : i32
    return %arg0, %c0_i32 : i32, i32
  }
  func.func @transform_7(%arg0: i32, %arg1: i32) -> (i32, i32) {
    %c0_i32 = arith.constant 0 : i32
    %c0_i32_0 = arith.constant 0 : i32
    return %arg0, %c0_i32 : i32, i32
  }
}

</mosaic_0001>

<llo_original>
// kernel: tpu_custom_call.1
$region0: #{tpu_custom_call.1}
  #allocation0 [shape = 'u32[]', space=smem, size = 0x4, offset = 0x4, fixed_abs, tag = 'smem constant byte address 0x4 - core index']
  #allocation1 [shape = 'u32[144,128]{1,0:T(1,128)}', space=vmem, size = 0x12000, scoped, tag = 'internal scratch']
  #allocation2 [shape = 'f32[8,128]{1,0:T(8,128)}', space=vmem, size = 0x1000, scoped, tag = 'scratch operand']
  #allocation3 [shape = 'f32[1]{0:T(128)S(6)}', space=smem, size = 0x200, scoped, tag = 'scoped memory for tpu_custom_call.1']
  %s0 = inlined_call_operand.hbm [shape: bf16[8,256], index: 0, kind: input, shape index: {}]
  %s1 = inlined_call_operand.hbm [shape: f32[8,128], index: 1, kind: input, shape index: {}]
  %s2 = inlined_call_operand.vmem [shape: f32[2,8], index: 2, kind: input, shape index: {}]
  %s3 = inlined_call_operand.hbm [shape: f32[128,128], index: 3, kind: input, shape index: {}]
  %s4 = inlined_call_operand.<no memory space> [shape: f32[1], index: 4, kind: input, shape index: {}]
  %s5 = inlined_call_operand.hbm [shape: f32[2,128], index: 5, kind: output, shape index: {0}]
  %s6 = inlined_call_operand.hbm [shape: f32[2,128], index: 6, kind: output, shape index: {1}]
  %s7 = inlined_call_operand.hbm [shape: f32[2,128], index: 7, kind: output, shape index: {2}]
  %8 = xla_tuple %s5, %s6, %s7
  %s9 = sld [smem:[#allocation0]]
  $region89: #{tpu_custom_call.1} parent=0
    _
  %s11 = ssub.s32 1, %s9
  %s12 = scalar_select 0, %s11, %s9
  %13 = sst [smem:[#allocation3]] %s4
  $region1: #{tpu_custom_call.1} parent=0
    #allocation4 [shape = 'u8[4096]{0}', space=vmem, size = 0x1000, scoped, tag = 'input window, operand 0']
    #allocation5 [shape = 's32[2]{0}', space=sflag, size = 0x8, scoped, tag = 'scoped memory for tpu_custom_call.1']
    #allocation6 [shape = 's32[2]{0}', space=sflag, size = 0x8, scoped, tag = 'scoped memory for tpu_custom_call.1']
    #allocation7 [shape = 'u8[4096]{0}', space=vmem, size = 0x1000, scoped, tag = 'input window, operand 1, single buffered']
    #allocation8 [shape = 's32[1]{0}', space=sflag, size = 0x4, scoped, tag = 'scoped memory for tpu_custom_call.1']
    #allocation9 [shape = 'u8[65536]{0}', space=vmem, size = 0x10000, scoped, tag = 'input window, operand 3, single buffered']
    #allocation10 [shape = 'u8[1024]{0}', space=vmem, size = 0x400, scoped, tag = 'output window, operand 0, single buffered']
    #allocation11 [shape = 'u8[1024]{0}', space=vmem, size = 0x400, scoped, tag = 'output window, operand 1, single buffered']
    #allocation12 [shape = 's32[1]{0}', space=sflag, size = 0x4, scoped, tag = 'scoped memory for tpu_custom_call.1']
    #allocation13 [shape = 'u8[1024]{0}', space=vmem, size = 0x400, scoped, tag = 'output window, operand 2, single buffered']
    %14 = vsyncpa [#allocation5], 0
    %s15 = scalar_lea.sflag [#allocation5], 1
    %16 = vsyncpa %s15, 0
    %17 = vsyncpa [#allocation8], 0
    %18 = vsyncpa [#allocation6], 0
    %19 = vsyncpa [#allocation12], 0
    loop: start=0, step=1, limit=4
    $region2: #{tpu_custom_call.1} parent=1 // loop_pre_header
      _
    $region3: #{tpu_custom_call.1} parent=1 // loop_header
      %s21 = sphi 0, %s25
      %p22 = scmp.ge.s32.totalorder %s21, 4
      %s28 = sphi 0, %s40
      %s29 = sphi 0, %s36
      %s30 = sphi 0, %s28
      %s31 = sphi 0, %s29
      %s32 = sphi 0, %s30
      %s33 = sphi 0, %s31
      %s45 = sphi 0, %s47
      %s48 = sphi 0, %s45
      %s49 = sphi 0, %s48
      %s65 = sphi 0, %s49
      %s69 = sphi 0, %s69
      %s71 = sphi 0, %s69
      %s72 = sphi 0, %s71
      %s86 = sphi 0, %s72
      %s90 = sphi 0, %s90
      %s92 = sphi 0, %s90
      %s93 = sphi 0, %s92
      %s107 = sphi 0, %s93
      %s111 = sphi 0, %s111
      %s113 = sphi 0, %s111
      %s114 = sphi 0, %s113
      %s128 = sphi 0, %s114
      %s132 = sphi 0, %s132
      %s134 = sphi 0, %s132
      %s135 = sphi 0, %s134
      %s149 = sphi 0, %s135
      %s155 = sphi 0, %s157
      %s158 = sphi 0, %s155
      %s159 = sphi 0, %s158
      %s175 = sphi 0, %s159
      %s181 = sphi 0, %s183
      %s184 = sphi 0, %s181
      %s185 = sphi 0, %s184
      %s201 = sphi 0, %s185
      %s207 = sphi 0, %s209
      %s210 = sphi 0, %s207
      %s211 = sphi 0, %s210
      %s227 = sphi 0, %s211
    $region4: #{tpu_custom_call.1} parent=1 // loop_header_branch
      %24 = sbr.rel (%p22) target = $region8
    $region5: #{tpu_custom_call.1} parent=1 // loop_body
      %s26 = ssub.s32 %s21, 1
      %s27 = ssub.s32 %s21, 2
      %s34 = sadd.s32 1, %s29
      %p35 = scmp.ge.s32.totalorder %s34, 2
      %s36 = scalar_select %p35, 0, %s34
      %s37 = sadd.s32 1, %s28
      %s38 = scalar_select %p35, %s37, %s28
      %p39 = scmp.ge.s32.totalorder %s38, 1
      %s40 = scalar_select %p39, 0, %s38
      %s41 = ssub.s32 %s28, %s40
      %s42 = ssub.s32 %s29, %s36
      %s43 = sor.u32 %s41, %s42
      %p44 = scmp.eq.s32.totalorder %s43, 0
      %s46 = sadd.s32 %s45, 1
      %s47 = scalar_select %p44, %s45, %s46
      %p50 = pneg %p44
      %p51 = scmp.eq.s32.totalorder %s21, 1
      %p52 = por %p50, %p51
      %p53 = scmp.ne.s32.totalorder %s45, %s48
      %p54 = scmp.eq.s32.totalorder %s21, 0
      %p55 = por %p53, %p54
      %p56 = scmp.ne.s32.totalorder %s45, %s48
      %p57 = scmp.eq.s32.totalorder %s26, 1
      %p58 = por %p56, %p57
      %p59 = scmp.ne.s32.totalorder %s48, %s49
      %p60 = scmp.eq.s32.totalorder %s26, 0
      %p61 = por %p59, %p60
      %p62 = scmp.ne.s32.totalorder %s48, %s49
      %p63 = scmp.eq.s32.totalorder %s27, 1
      %p64 = por %p62, %p63
      %p66 = scmp.ne.s32.totalorder %s49, %s65
      %p67 = scmp.eq.s32.totalorder %s27, 0
      %p68 = por %p66, %p67
      %s70 = sadd.s32 %s69, 1
      %p73 = scmp.eq.s32.totalorder %s21, 1
      %p74 = scmp.ne.s32.totalorder %s69, %s71
      %p75 = scmp.eq.s32.totalorder %s21, 0
      %p76 = por %p74, %p75
      %p77 = scmp.ne.s32.totalorder %s69, %s71
      %p78 = scmp.eq.s32.totalorder %s26, 1
      %p79 = por %p77, %p78
      %p80 = scmp.ne.s32.totalorder %s71, %s72
      %p81 = scmp.eq.s32.totalorder %s26, 0
      %p82 = por %p80, %p81
      %p83 = scmp.ne.s32.totalorder %s71, %s72
      %p84 = scmp.eq.s32.totalorder %s27, 1
      %p85 = por %p83, %p84
      %p87 = scmp.ne.s32.totalorder %s72, %s86
      %p88 = scmp.eq.s32.totalorder %s27, 0
      %p89 = por %p87, %p88
      %s91 = sadd.s32 %s90, 1
      %p94 = scmp.eq.s32.totalorder %s21, 1
      %p95 = scmp.ne.s32.totalorder %s90, %s92
      %p96 = scmp.eq.s32.totalorder %s21, 0
      %p97 = por %p95, %p96
      %p98 = scmp.ne.s32.totalorder %s90, %s92
      %p99 = scmp.eq.s32.totalorder %s26, 1
      %p100 = por %p98, %p99
      %p101 = scmp.ne.s32.totalorder %s92, %s93
      %p102 = scmp.eq.s32.totalorder %s26, 0
      %p103 = por %p101, %p102
      %p104 = scmp.ne.s32.totalorder %s92, %s93
      %p105 = scmp.eq.s32.totalorder %s27, 1
      %p106 = por %p104, %p105
      %p108 = scmp.ne.s32.totalorder %s93, %s107
      %p109 = scmp.eq.s32.totalorder %s27, 0
      %p110 = por %p108, %p109
      %s112 = sadd.s32 %s111, 1
      %p115 = scmp.eq.s32.totalorder %s21, 1
      %p116 = scmp.ne.s32.totalorder %s111, %s113
      %p117 = scmp.eq.s32.totalorder %s21, 0
      %p118 = por %p116, %p117
      %p119 = scmp.ne.s32.totalorder %s111, %s113
      %p120 = scmp.eq.s32.totalorder %s26, 1
      %p121 = por %p119, %p120
      %p122 = scmp.ne.s32.totalorder %s113, %s114
      %p123 = scmp.eq.s32.totalorder %s26, 0
      %p124 = por %p122, %p123
      %p125 = scmp.ne.s32.totalorder %s113, %s114
      %p126 = scmp.eq.s32.totalorder %s27, 1
      %p127 = por %p125, %p126
      %p129 = scmp.ne.s32.totalorder %s114, %s128
      %p130 = scmp.eq.s32.totalorder %s27, 0
      %p131 = por %p129, %p130
      %s133 = sadd.s32 %s132, 1
      %p136 = scmp.eq.s32.totalorder %s21, 1
      %p137 = scmp.ne.s32.totalorder %s132, %s134
      %p138 = scmp.eq.s32.totalorder %s21, 0
      %p139 = por %p137, %p138
      %p140 = scmp.ne.s32.totalorder %s132, %s134
      %p141 = scmp.eq.s32.totalorder %s26, 1
      %p142 = por %p140, %p141
      %p143 = scmp.ne.s32.totalorder %s134, %s135
      %p144 = scmp.eq.s32.totalorder %s26, 0
      %p145 = por %p143, %p144
      %p146 = scmp.ne.s32.totalorder %s134, %s135
      %p147 = scmp.eq.s32.totalorder %s27, 1
      %p148 = por %p146, %p147
      %p150 = scmp.ne.s32.totalorder %s135, %s149
      %p151 = scmp.eq.s32.totalorder %s27, 0
      %p152 = por %p150, %p151
      %s153 = ssub.s32 %s28, %s40
      %p154 = scmp.eq.s32.totalorder %s153, 0
      %s156 = sadd.s32 %s155, 1
      %s157 = scalar_select %p154, %s155, %s156
      %p160 = pneg %p154
      %p161 = scmp.eq.s32.totalorder %s21, 1
      %p162 = por %p160, %p161
      %p163 = scmp.ne.s32.totalorder %s155, %s158
      %p164 = scmp.eq.s32.totalorder %s21, 0
      %p165 = por %p163, %p164
      %p166 = scmp.ne.s32.totalorder %s155, %s158
      %p167 = scmp.eq.s32.totalorder %s26, 1
      %p168 = por %p166, %p167
      %p169 = scmp.ne.s32.totalorder %s158, %s159
      %p170 = scmp.eq.s32.totalorder %s26, 0
      %p171 = por %p169, %p170
      %p172 = scmp.ne.s32.totalorder %s158, %s159
      %p173 = scmp.eq.s32.totalorder %s27, 1
      %p174 = por %p172, %p173
      %p176 = scmp.ne.s32.totalorder %s159, %s175
      %p177 = scmp.eq.s32.totalorder %s27, 0
      %p178 = por %p176, %p177
      %s179 = ssub.s32 %s28, %s40
      %p180 = scmp.eq.s32.totalorder %s179, 0
      %s182 = sadd.s32 %s181, 1
      %s183 = scalar_select %p180, %s181, %s182
      %p186 = pneg %p180
      %p187 = scmp.eq.s32.totalorder %s21, 1
      %p188 = por %p186, %p187
      %p189 = scmp.ne.s32.totalorder %s181, %s184
      %p190 = scmp.eq.s32.totalorder %s21, 0
      %p191 = por %p189, %p190
      %p192 = scmp.ne.s32.totalorder %s181, %s184
      %p193 = scmp.eq.s32.totalorder %s26, 1
      %p194 = por %p192, %p193
      %p195 = scmp.ne.s32.totalorder %s184, %s185
      %p196 = scmp.eq.s32.totalorder %s26, 0
      %p197 = por %p195, %p196
      %p198 = scmp.ne.s32.totalorder %s184, %s185
      %p199 = scmp.eq.s32.totalorder %s27, 1
      %p200 = por %p198, %p199
      %p202 = scmp.ne.s32.totalorder %s185, %s201
      %p203 = scmp.eq.s32.totalorder %s27, 0
      %p204 = por %p202, %p203
      %s205 = ssub.s32 %s28, %s40
      %p206 = scmp.eq.s32.totalorder %s205, 0
      %s208 = sadd.s32 %s207, 1
      %s209 = scalar_select %p206, %s207, %s208
      %p212 = pneg %p206
      %p213 = scmp.eq.s32.totalorder %s21, 1
      %p214 = por %p212, %p213
      %p215 = scmp.ne.s32.totalorder %s207, %s210
      %p216 = scmp.eq.s32.totalorder %s21, 0
      %p217 = por %p215, %p216
      %p218 = scmp.ne.s32.totalorder %s207, %s210
      %p219 = scmp.eq.s32.totalorder %s26, 1
      %p220 = por %p218, %p219
      %p221 = scmp.ne.s32.totalorder %s210, %s211
      %p222 = scmp.eq.s32.totalorder %s26, 0
      %p223 = por %p221, %p222
      %p224 = scmp.ne.s32.totalorder %s210, %s211
      %p225 = scmp.eq.s32.totalorder %s27, 1
      %p226 = por %p224, %p225
      %p228 = scmp.ne.s32.totalorder %s211, %s227
      %p229 = scmp.eq.s32.totalorder %s27, 0
      %p230 = por %p228, %p229
      %p231 = scmp.le.s32.totalorder 1, %s21
      %p232 = scmp.lt.s32.totalorder %s21, 3
      %p233 = pnand %p231, %p232
      %p234 = pneg %p233
      // Predicated region
      $region9: #{tpu_custom_call.1} parent=5 // pred_check
        _
      $region10: #{tpu_custom_call.1} parent=5 // pred_check_branch
        %236 = sbr.rel (%p233) target = $region12
      $region11: #{tpu_custom_call.1} parent=5 // pred_region
        %s237 = ssub.s32 %s21, 1
        // Predicated region
        $region13: #{tpu_custom_call.1} parent=11 // pred_check
          %p238 = pneg %p82
        $region14: #{tpu_custom_call.1} parent=11 // pred_check_branch
          %240 = sbr.rel (%p238) target = $region16
        $region15: #{tpu_custom_call.1} parent=11 // pred_region
          %s242 = ssub.s32 128, 128
          %243 = vsyncadd [#allocation8], %s242
          %s245 = sshll.u32 [#allocation7], 4
          %s246 = int_to_ptr.vmem [resolvable:$true] %s245
          %248 = dma.hbm_to_vmem [thread:$0]  %s1, 128, %s246, [#allocation8]
        $region16: #{tpu_custom_call.1} parent=11 // pred_fallthru
          _
        // Predicated region
        $region17: #{tpu_custom_call.1} parent=11 // pred_check
          %p249 = pneg %p103
        $region18: #{tpu_custom_call.1} parent=11 // pred_check_branch
          %251 = sbr.rel (%p249) target = $region20
        $region19: #{tpu_custom_call.1} parent=11 // pred_region
          _
        $region20: #{tpu_custom_call.1} parent=11 // pred_fallthru
          _
        // Predicated region
        $region21: #{tpu_custom_call.1} parent=11 // pred_check
          %p252 = pneg %p124
        $region22: #{tpu_custom_call.1} parent=11 // pred_check_branch
          %254 = sbr.rel (%p252) target = $region24
        $region23: #{tpu_custom_call.1} parent=11 // pred_region
          %s256 = ssub.s32 2048, 2048
          %257 = vsyncadd [#allocation8], %s256
          %s258 = sshll.u32 [#allocation9], 4
          %s259 = int_to_ptr.vmem [resolvable:$true] %s258
          %264 = dma.hbm_to_vmem [thread:$0]  %s3, 2048, %s259, [#allocation8], 128, 128, 8
        $region24: #{tpu_custom_call.1} parent=11 // pred_fallthru
          _
        // Predicated region
        $region25: #{tpu_custom_call.1} parent=11 // pred_check
          %p265 = pneg %p145
        $region26: #{tpu_custom_call.1} parent=11 // pred_check_branch
          %267 = sbr.rel (%p265) target = $region28
        $region27: #{tpu_custom_call.1} parent=11 // pred_region
          _
        $region28: #{tpu_custom_call.1} parent=11 // pred_fallthru
          _
      $region12: #{tpu_custom_call.1} parent=5 // pred_fallthru
        _
      %p268 = scmp.lt.s32.totalorder %s21, 2
      // Predicated region
      $region29: #{tpu_custom_call.1} parent=5 // pred_check
        %p269 = pneg %p268
      $region30: #{tpu_custom_call.1} parent=5 // pred_check_branch
        %271 = sbr.rel (%p269) target = $region32
      $region31: #{tpu_custom_call.1} parent=5 // pred_region
        // Predicated region
        $region33: #{tpu_custom_call.1} parent=31 // pred_check
          %p272 = pneg %p55
        $region34: #{tpu_custom_call.1} parent=31 // pred_check_branch
          %274 = sbr.rel (%p272) target = $region36
        $region35: #{tpu_custom_call.1} parent=31 // pred_region
          %s275 = sand.u32 %s45, 1
          %s276 = scalar_lea.sflag [#allocation5], %s275
          %s277 = sand.u32 %s45, 1
          %s278 = smul.addr %s277, 4
          %s279 = scalar_lea.vmem [#allocation4], %s278
          %s281 = ssub.s32 64, 64
          %282 = vsyncadd %s276, %s281
          %s283 = smul.addr %s28, 2
          %s284 = sadd.s32 %s29, %s283
          %s285 = smul.addr %s284, 64
          %s286 = scalar_lea.hbm %s0, %s285
          %s288 = sshll.u32 %s279, 4
          %s289 = int_to_ptr.vmem [resolvable:$true] %s288
          %291 = dma.hbm_to_vmem [thread:$0]  %s286, 64, %s289, %s276
        $region36: #{tpu_custom_call.1} parent=31 // pred_fallthru
          _
      $region32: #{tpu_custom_call.1} parent=5 // pred_fallthru
        _
      %p292 = scmp.le.s32.totalorder 1, %s21
      %p293 = scmp.lt.s32.totalorder %s21, 3
      %p294 = pnand %p292, %p293
      %p295 = pneg %p294
      // Predicated region
      $region37: #{tpu_custom_call.1} parent=5 // pred_check
        _
      $region38: #{tpu_custom_call.1} parent=5 // pred_check_branch
        %297 = sbr.rel (%p294) target = $region40
      $region39: #{tpu_custom_call.1} parent=5 // pred_region
        %s298 = ssub.s32 %s21, 1
        %s299 = sand.u32 %s48, 1
        %s300 = scalar_lea.sflag [#allocation5], %s299
        %s301 = sand.u32 %s48, 1
        %s302 = smul.addr %s301, 4
        %s303 = scalar_lea.vmem [#allocation4], %s302
        // Predicated region
        $region41: #{tpu_custom_call.1} parent=39 // pred_check
          %p304 = pneg %p61
        $region42: #{tpu_custom_call.1} parent=39 // pred_check_branch
          %306 = sbr.rel (%p304) target = $region44
        $region43: #{tpu_custom_call.1} parent=39 // pred_region
          %307 = dma.done %s300, 64
        $region44: #{tpu_custom_call.1} parent=39 // pred_fallthru
          _
        // Predicated region
        $region45: #{tpu_custom_call.1} parent=39 // pred_check
          %p308 = pneg %p82
        $region46: #{tpu_custom_call.1} parent=39 // pred_check_branch
          %310 = sbr.rel (%p308) target = $region48
        $region47: #{tpu_custom_call.1} parent=39 // pred_region
          %311 = dma.done [#allocation8], 128
        $region48: #{tpu_custom_call.1} parent=39 // pred_fallthru
          _
        // Predicated region
        $region49: #{tpu_custom_call.1} parent=39 // pred_check
          %p312 = pneg %p124
        $region50: #{tpu_custom_call.1} parent=39 // pred_check_branch
          %314 = sbr.rel (%p312) target = $region52
        $region51: #{tpu_custom_call.1} parent=39 // pred_region
          %315 = dma.done [#allocation8], 2048
        $region52: #{tpu_custom_call.1} parent=39 // pred_fallthru
          _
        %s316 = sand.u32 %s48, 1
        %s317 = scalar_lea.sflag [#allocation5], %s316
        %s318 = sand.u32 %s48, 1
        %s319 = smul.addr %s318, 4
        %s320 = scalar_lea.vmem [#allocation4], %s319
        %p321 = pneg %p61
        %p322 = pneg %p58
        %p323 = pneg %p82
        %p324 = pneg %p79
        %p325 = pneg %p103
        %p326 = pneg %p100
        %p327 = pneg %p124
        %p328 = pneg %p121
        %p329 = pneg %p145
        %p330 = pneg %p142
        %p331 = pneg %p171
        %p332 = pneg %p168
        %p333 = pneg %p197
        %p334 = pneg %p194
        %p335 = pneg %p223
        %p336 = pneg %p220
        %p337 = scmp.eq.s32.totalorder %s31, 0
        // Predicated region
        $region53: #{tpu_custom_call.1} parent=39 // pred_check
          %p338 = pneg %p337
        $region54: #{tpu_custom_call.1} parent=39 // pred_check_branch
          %340 = sbr.rel (%p338) target = $region56
        $region55: #{tpu_custom_call.1} parent=39 // pred_region
          %341 = vst [vmem:[#allocation2] sm:$0xff] 0.0
        $region56: #{tpu_custom_call.1} parent=39 // pred_fallthru
          _
        %v342 = vld [vmem:[#allocation2] sm:$0xff]
        %v343 = vld [vmem:[%s303] sm:$0xf]
        %v344 = vunpack.c.l.bf16 %v343
        %v345 = vadd.f32 %v342, %v344
        %346 = vst [vmem:[#allocation2] sm:$0xff] %v345
        %p347 = scmp.eq.s32.totalorder %s31, 1
        // Predicated region
        $region57: #{tpu_custom_call.1} parent=39 // pred_check
          %p348 = pneg %p347
        $region58: #{tpu_custom_call.1} parent=39 // pred_check_branch
          %350 = sbr.rel (%p348) target = $region60
        $region59: #{tpu_custom_call.1} parent=39 // pred_region
          %v351 = vld [vmem:[#allocation2] sm:$0xff]
          %352 = vadd.xlane.f32.xlu0 %v351
          %v353 = vpop.xlane.xlu0 %352
          %v354 = vld [vmem:[#allocation7] sm:$0xff]
          %v355 = vmul.f32 %v353, %v354
          %v356 = vld [vmem:[%s2] sm:$0x3]
          %vm357 = vcmask 64512
          %v359 = vsel %vm357, %v356, 0
          %361 = vmatprep.subr.mxu0 0.0
          %362 = vmatpush1.msra.mxu0 %v355
          %363 = vmatprep.subr.mxu0 0.0
          %364 = vmatpush1.msra.mxu0 0.0
          %365 = vmatprep.subr.mxu0 0.0
          %366 = vmatpush1.msra.mxu0 0.0
          %367 = vmatprep.subr.mxu0 0.0
          %368 = vmatpush1.msra.mxu0 0.0
          %369 = vmatprep.subr.mxu0 0.0
          %370 = vmatpush1.msra.mxu0 0.0
          %371 = vmatprep.subr.mxu0 0.0
          %372 = vmatpush1.msra.mxu0 0.0
          %373 = vmatprep.subr.mxu0 0.0
          %374 = vmatpush1.msra.mxu0 0.0
          %375 = vmatprep.subr.mxu0 0.0
          %376 = vmatpush1.msra.mxu0 0.0
          %377 = vmatprep.subr.mxu0 0.0
          %378 = vmatpush1.msra.mxu0 0.0
          %379 = vmatprep.subr.mxu0 0.0
          %380 = vmatpush1.msra.mxu0 0.0
          %381 = vmatprep.subr.mxu0 0.0
          %382 = vmatpush1.msra.mxu0 0.0
          %383 = vmatprep.subr.mxu0 0.0
          %384 = vmatpush1.msra.mxu0 0.0
          %385 = vmatprep.subr.mxu0 0.0
          %386 = vmatpush1.msra.mxu0 0.0
          %387 = vmatprep.subr.mxu0 0.0
          %388 = vmatpush1.msra.mxu0 0.0
          %389 = vmatprep.subr.mxu0 0.0
          %390 = vmatpush1.msra.mxu0 0.0
          %391 = vmatprep.subr.mxu0 0.0
          %392 = vmatpush1.msra.mxu0 0.0
          %393 = vmatprep.subr.mxu0 0.0
          %394 = vmatpush1.msra.mxu0 0.0
          %395 = vmatprep.subr.mxu0 0.0
          %396 = vmatpush1.msra.mxu0 0.0
          %397 = vmatprep.subr.mxu0 0.0
          %398 = vmatpush1.msra.mxu0 0.0
          %399 = vmatprep.subr.mxu0 0.0
          %400 = vmatpush1.msra.mxu0 0.0
          %401 = vmatprep.subr.mxu0 0.0
          %402 = vmatpush1.msra.mxu0 0.0
          %403 = vmatprep.subr.mxu0 0.0
          %404 = vmatpush1.msra.mxu0 0.0
          %405 = vmatprep.subr.mxu0 0.0
          %406 = vmatpush1.msra.mxu0 0.0
          %407 = vmatprep.subr.mxu0 0.0
          %408 = vmatpush1.msra.mxu0 0.0
          %409 = vmatprep.subr.mxu0 0.0
          %410 = vmatpush1.msra.mxu0 0.0
          %411 = vmatprep.subr.mxu0 0.0
          %412 = vmatpush1.msra.mxu0 0.0
          %413 = vmatprep.subr.mxu0 0.0
          %414 = vmatpush1.msra.mxu0 0.0
          %415 = vmatprep.subr.mxu0 0.0
          %416 = vmatpush1.msra.mxu0 0.0
          %417 = vmatprep.subr.mxu0 0.0
          %418 = vmatpush1.msra.mxu0 0.0
          %419 = vmatprep.subr.mxu0 0.0
          %420 = vmatpush1.msra.mxu0 0.0
          %421 = vmatprep.subr.mxu0 0.0
          %422 = vmatpush1.msra.mxu0 0.0
          %423 = vmatprep.subr.mxu0 0.0
          %424 = vmatpush1.msra.mxu0 0.0
          %425 = vmatprep.mubr.f32.mxu0 0.0
          %426 = vmatmul.mubr.f32.gmra.mrb[0].mxu0 %v359
          %v427 = vpop.f32.mrb[0].mxu0
          %v428 = vadd.f32 0.0, %v427
          %v429 = vpop.f32.mrb[0].mxu0
          %430 = vdwg.mxu0
          %v431 = vmul.f32 %v428, %v428
          %vm432 = vcmask 1041408
          %v433 = vsel %vm432, %v431, 0.0
          %434 = vadd.xlane.f32.xlu0 %v433
          %v435 = vpop.xlane.xlu0 %434
          %v436 = vmax.f32 %v435, 1e-24
          %v437 = vrsqrt.pop %v436
          %v438 = vmul.f32 %v428, %v437
          %439 = vst [vmem:[#allocation10] sm:$0x3] %v438
          %v440 = vld [vmem:[#allocation9] sm:$0xff]
          %v441 = vld [vmem:[#allocation9 + $0x8] sm:$0xff]
          %v442 = vld [vmem:[#allocation9 + $0x10] sm:$0xff]
          %v443 = vld [vmem:[#allocation9 + $0x18] sm:$0xff]
          %v444 = vld [vmem:[#allocation9 + $0x20] sm:$0xff]
          %v445 = vld [vmem:[#allocation9 + $0x28] sm:$0xff]
          %v446 = vld [vmem:[#allocation9 + $0x30] sm:$0xff]
          %v447 = vld [vmem:[#allocation9 + $0x38] sm:$0xff]
          %v448 = vld [vmem:[#allocation9 + $0x40] sm:$0xff]
          %v449 = vld [vmem:[#allocation9 + $0x48] sm:$0xff]
          %v450 = vld [vmem:[#allocation9 + $0x50] sm:$0xff]
          %v451 = vld [vmem:[#allocation9 + $0x58] sm:$0xff]
          %v452 = vld [vmem:[#allocation9 + $0x60] sm:$0xff]
          %v453 = vld [vmem:[#allocation9 + $0x68] sm:$0xff]
          %v454 = vld [vmem:[#allocation9 + $0x70] sm:$0xff]
          %v455 = vld [vmem:[#allocation9 + $0x78] sm:$0xff]
          %v456 = vmul.f32 %v440, %v440
          %v457 = vmul.f32 %v441, %v441
          %v458 = vmul.f32 %v442, %v442
          %v459 = vmul.f32 %v443, %v443
          %v460 = vmul.f32 %v444, %v444
          %v461 = vmul.f32 %v445, %v445
          %v462 = vmul.f32 %v446, %v446
          %v463 = vmul.f32 %v447, %v447
          %v464 = vmul.f32 %v448, %v448
          %v465 = vmul.f32 %v449, %v449
          %v466 = vmul.f32 %v450, %v450
          %v467 = vmul.f32 %v451, %v451
          %v468 = vmul.f32 %v452, %v452
          %v469 = vmul.f32 %v453, %v453
          %v470 = vmul.f32 %v454, %v454
          %v471 = vmul.f32 %v455, %v455
          %472 = vadd.xlane.f32.xlu0 %v456
          %v473 = vpop.xlane.xlu0 %472
          %474 = vadd.xlane.f32.xlu0 %v457
          %v475 = vpop.xlane.xlu0 %474
          %476 = vadd.xlane.f32.xlu0 %v458
          %v477 = vpop.xlane.xlu0 %476
          %478 = vadd.xlane.f32.xlu0 %v459
          %v479 = vpop.xlane.xlu0 %478
          %480 = vadd.xlane.f32.xlu0 %v460
          %v481 = vpop.xlane.xlu0 %480
          %482 = vadd.xlane.f32.xlu0 %v461
          %v483 = vpop.xlane.xlu0 %482
          %484 = vadd.xlane.f32.xlu0 %v462
          %v485 = vpop.xlane.xlu0 %484
          %486 = vadd.xlane.f32.xlu0 %v463
          %v487 = vpop.xlane.xlu0 %486
          %488 = vadd.xlane.f32.xlu0 %v464
          %v489 = vpop.xlane.xlu0 %488
          %490 = vadd.xlane.f32.xlu0 %v465
          %v491 = vpop.xlane.xlu0 %490
          %492 = vadd.xlane.f32.xlu0 %v466
          %v493 = vpop.xlane.xlu0 %492
          %494 = vadd.xlane.f32.xlu0 %v467
          %v495 = vpop.xlane.xlu0 %494
          %496 = vadd.xlane.f32.xlu0 %v468
          %v497 = vpop.xlane.xlu0 %496
          %498 = vadd.xlane.f32.xlu0 %v469
          %v499 = vpop.xlane.xlu0 %498
          %500 = vadd.xlane.f32.xlu0 %v470
          %v501 = vpop.xlane.xlu0 %500
          %502 = vadd.xlane.f32.xlu0 %v471
          %v503 = vpop.xlane.xlu0 %502
          %v504 = vmax.f32 %v473, 1e-24
          %v505 = vmax.f32 %v475, 1e-24
          %v506 = vmax.f32 %v477, 1e-24
          %v507 = vmax.f32 %v479, 1e-24
          %v508 = vmax.f32 %v481, 1e-24
          %v509 = vmax.f32 %v483, 1e-24
          %v510 = vmax.f32 %v485, 1e-24
          %v511 = vmax.f32 %v487, 1e-24
          %v512 = vmax.f32 %v489, 1e-24
          %v513 = vmax.f32 %v491, 1e-24
          %v514 = vmax.f32 %v493, 1e-24
          %v515 = vmax.f32 %v495, 1e-24
          %v516 = vmax.f32 %v497, 1e-24
          %v517 = vmax.f32 %v499, 1e-24
          %v518 = vmax.f32 %v501, 1e-24
          %v519 = vmax.f32 %v503, 1e-24
          %v520 = vrsqrt.pop %v504
          %v521 = vrsqrt.pop %v505
          %v522 = vrsqrt.pop %v506
          %v523 = vrsqrt.pop %v507
          %v524 = vrsqrt.pop %v508
          %v525 = vrsqrt.pop %v509
          %v526 = vrsqrt.pop %v510
          %v527 = vrsqrt.pop %v511
          %v528 = vrsqrt.pop %v512
          %v529 = vrsqrt.pop %v513
          %v530 = vrsqrt.pop %v514
          %v531 = vrsqrt.pop %v515
          %v532 = vrsqrt.pop %v516
          %v533 = vrsqrt.pop %v517
          %v534 = vrsqrt.pop %v518
          %v535 = vrsqrt.pop %v519
          %v536 = vmul.f32 %v440, %v520
          %v537 = vmul.f32 %v441, %v521
          %v538 = vmul.f32 %v442, %v522
          %v539 = vmul.f32 %v443, %v523
          %v540 = vmul.f32 %v444, %v524
          %v541 = vmul.f32 %v445, %v525
          %v542 = vmul.f32 %v446, %v526
          %v543 = vmul.f32 %v447, %v527
          %v544 = vmul.f32 %v448, %v528
          %v545 = vmul.f32 %v449, %v529
          %v546 = vmul.f32 %v450, %v530
          %v547 = vmul.f32 %v451, %v531
          %v548 = vmul.f32 %v452, %v532
          %v549 = vmul.f32 %v453, %v533
          %v550 = vmul.f32 %v454, %v534
          %v551 = vmul.f32 %v455, %v535
          %552 = vmatprep.subr.mxu0 0.0
          %553 = vmatpush1.xpose.msra.mxu0 %v536
          %554 = vmatprep.subr.mxu0 0.0
          %555 = vmatpush1.xpose.msra.mxu0 %v537
          %556 = vmatprep.subr.mxu0 0.0
          %557 = vmatpush1.xpose.msra.mxu0 %v538
          %558 = vmatprep.subr.mxu0 0.0
          %559 = vmatpush1.xpose.msra.mxu0 %v539
          %560 = vmatprep.subr.mxu0 0.0
          %561 = vmatpush1.xpose.msra.mxu0 %v540
          %562 = vmatprep.subr.mxu0 0.0
          %563 = vmatpush1.xpose.msra.mxu0 %v541
          %564 = vmatprep.subr.mxu0 0.0
          %565 = vmatpush1.xpose.msra.mxu0 %v542
          %566 = vmatprep.subr.mxu0 0.0
          %567 = vmatpush1.xpose.msra.mxu0 %v543
          %568 = vmatprep.subr.mxu0 0.0
          %569 = vmatpush1.xpose.msra.mxu0 %v544
          %570 = vmatprep.subr.mxu0 0.0
          %571 = vmatpush1.xpose.msra.mxu0 %v545
          %572 = vmatprep.subr.mxu0 0.0
          %573 = vmatpush1.xpose.msra.mxu0 %v546
          %574 = vmatprep.subr.mxu0 0.0
          %575 = vmatpush1.xpose.msra.mxu0 %v547
          %576 = vmatprep.subr.mxu0 0.0
          %577 = vmatpush1.xpose.msra.mxu0 %v548
          %578 = vmatprep.subr.mxu0 0.0
          %579 = vmatpush1.xpose.msra.mxu0 %v549
          %580 = vmatprep.subr.mxu0 0.0
          %581 = vmatpush1.xpose.msra.mxu0 %v550
          %582 = vmatprep.subr.mxu0 0.0
          %583 = vmatpush1.xpose.msra.mxu0 %v551
          %584 = vmatprep.subr.mxu0 0.0
          %585 = vmatpush1.xpose.msra.mxu0 0.0
          %586 = vmatprep.subr.mxu0 0.0
          %587 = vmatpush1.xpose.msra.mxu0 0.0
          %588 = vmatprep.subr.mxu0 0.0
          %589 = vmatpush1.xpose.msra.mxu0 0.0
          %590 = vmatprep.subr.mxu0 0.0
          %591 = vmatpush1.xpose.msra.mxu0 0.0
          %592 = vmatprep.subr.mxu0 0.0
          %593 = vmatpush1.xpose.msra.mxu0 0.0
          %594 = vmatprep.subr.mxu0 0.0
          %595 = vmatpush1.xpose.msra.mxu0 0.0
          %596 = vmatprep.subr.mxu0 0.0
          %597 = vmatpush1.xpose.msra.mxu0 0.0
          %598 = vmatprep.subr.mxu0 0.0
          %599 = vmatpush1.xpose.msra.mxu0 0.0
          %600 = vmatprep.subr.mxu0 0.0
          %601 = vmatpush1.xpose.msra.mxu0 0.0
          %602 = vmatprep.subr.mxu0 0.0
          %603 = vmatpush1.xpose.msra.mxu0 0.0
          %604 = vmatprep.subr.mxu0 0.0
          %605 = vmatpush1.xpose.msra.mxu0 0.0
          %606 = vmatprep.subr.mxu0 0.0
          %607 = vmatpush1.xpose.msra.mxu0 0.0
          %608 = vmatprep.subr.mxu0 0.0
          %609 = vmatpush1.xpose.msra.mxu0 0.0
          %610 = vmatprep.subr.mxu0 0.0
          %611 = vmatpush1.xpose.msra.mxu0 0.0
          %612 = vmatprep.subr.mxu0 0.0
          %613 = vmatpush1.xpose.msra.mxu0 0.0
          %614 = vmatprep.subr.mxu0 0.0
          %615 = vmatpush1.xpose.msra.mxu0 0.0
          %616 = vmatprep.mubr.f32.mxu0 0.0
          %617 = vmatmul.mubr.f32.gmra.mrb[0].mxu0 %v428
          %v618 = vpop.f32.mrb[0].mxu0
          %v619 = vadd.f32 0.0, %v618
          %v620 = vpop.f32.mrb[0].mxu0
          %621 = vdwg.mxu0
          %622 = vst [vmem:[#allocation11] sm:$0x3] %v619
          %s623 = sld [smem:[#allocation3]]
          %v624 = vstv %s623
          %v625 = vmul.f32 %v624, %v619
          %626 = vst [vmem:[#allocation13] sm:$0x3] %v625
        $region60: #{tpu_custom_call.1} parent=39 // pred_fallthru
          _
        // Predicated region
        $region61: #{tpu_custom_call.1} parent=39 // pred_check
          %p627 = pneg %p168
        $region62: #{tpu_custom_call.1} parent=39 // pred_check_branch
          %629 = sbr.rel (%p627) target = $region64
        $region63: #{tpu_custom_call.1} parent=39 // pred_region
          %s631 = ssub.s32 32, 32
          %632 = vsyncadd [#allocation6], %s631
          %s633 = smul.addr %s30, 32
          %s634 = scalar_lea.hbm %s5, %s633
          %s636 = sshll.u32 [#allocation10], 4
          %s637 = int_to_ptr.vmem [resolvable:$true] %s636
          %639 = dma.vmem_to_hbm [thread:$0]  %s637, 32, %s634, [#allocation6]
        $region64: #{tpu_custom_call.1} parent=39 // pred_fallthru
          _
        // Predicated region
        $region65: #{tpu_custom_call.1} parent=39 // pred_check
          %p640 = pneg %p194
        $region66: #{tpu_custom_call.1} parent=39 // pred_check_branch
          %642 = sbr.rel (%p640) target = $region68
        $region67: #{tpu_custom_call.1} parent=39 // pred_region
          %s644 = ssub.s32 32, 32
          %645 = vsyncadd [#allocation12], %s644
          %s646 = smul.addr %s30, 32
          %s647 = scalar_lea.hbm %s6, %s646
          %s649 = sshll.u32 [#allocation11], 4
          %s650 = int_to_ptr.vmem [resolvable:$true] %s649
          %652 = dma.vmem_to_hbm [thread:$0]  %s650, 32, %s647, [#allocation12]
        $region68: #{tpu_custom_call.1} parent=39 // pred_fallthru
          _
        // Predicated region
        $region69: #{tpu_custom_call.1} parent=39 // pred_check
          %p653 = pneg %p220
        $region70: #{tpu_custom_call.1} parent=39 // pred_check_branch
          %655 = sbr.rel (%p653) target = $region72
        $region71: #{tpu_custom_call.1} parent=39 // pred_region
          %s657 = ssub.s32 32, 32
          %658 = vsyncadd [#allocation12], %s657
          %s659 = smul.addr %s30, 32
          %s660 = scalar_lea.hbm %s7, %s659
          %s662 = sshll.u32 [#allocation13], 4
          %s663 = int_to_ptr.vmem [resolvable:$true] %s662
          %665 = dma.vmem_to_hbm [thread:$0]  %s663, 32, %s660, [#allocation12]
        $region72: #{tpu_custom_call.1} parent=39 // pred_fallthru
          _
        // Predicated region
        $region73: #{tpu_custom_call.1} parent=39 // pred_check
          %p666 = pneg %p168
        $region74: #{tpu_custom_call.1} parent=39 // pred_check_branch
          %668 = sbr.rel (%p666) target = $region76
        $region75: #{tpu_custom_call.1} parent=39 // pred_region
          %669 = dma.done [#allocation6], 32
        $region76: #{tpu_custom_call.1} parent=39 // pred_fallthru
          _
        // Predicated region
        $region77: #{tpu_custom_call.1} parent=39 // pred_check
          %p670 = pneg %p194
        $region78: #{tpu_custom_call.1} parent=39 // pred_check_branch
          %672 = sbr.rel (%p670) target = $region80
        $region79: #{tpu_custom_call.1} parent=39 // pred_region
          %673 = dma.done [#allocation12], 32
        $region80: #{tpu_custom_call.1} parent=39 // pred_fallthru
          _
        // Predicated region
        $region81: #{tpu_custom_call.1} parent=39 // pred_check
          %p674 = pneg %p220
        $region82: #{tpu_custom_call.1} parent=39 // pred_check_branch
          %676 = sbr.rel (%p674) target = $region84
        $region83: #{tpu_custom_call.1} parent=39 // pred_region
          %677 = dma.done [#allocation12], 32
        $region84: #{tpu_custom_call.1} parent=39 // pred_fallthru
          _
      $region40: #{tpu_custom_call.1} parent=5 // pred_fallthru
        _
      %p678 = scmp.le.s32.totalorder 2, %s21
      // Predicated region
      $region85: #{tpu_custom_call.1} parent=5 // pred_check
        %p679 = pneg %p678
      $region86: #{tpu_custom_call.1} parent=5 // pred_check_branch
        %681 = sbr.rel (%p679) target = $region88
      $region87: #{tpu_custom_call.1} parent=5 // pred_region
        %s682 = ssub.s32 %s21, 2
      $region88: #{tpu_custom_call.1} parent=5 // pred_fallthru
        _
    $region6: #{tpu_custom_call.1} parent=1 // loop_footer
      %s25 = sadd.s32 1, %s21
    $region7: #{tpu_custom_call.1} parent=1 // loop_footer_branch
      %20 = sbr.rel target = $region3
    $region8: #{tpu_custom_call.1} parent=1 // loop_exit
      _
    %683 = vsyncpa [#allocation5], 1
    %s684 = scalar_lea.sflag [#allocation5], 1
    %685 = vsyncpa %s684, 1
    %686 = vsyncpa [#allocation8], 1
    %687 = vsyncpa [#allocation6], 1
    %s688 = scalar_lea.sflag [#allocation6], 1
    %689 = vsyncpa %s688, 1
    %690 = vsyncpa [#allocation12], 1

</llo_original>
